<compile_context>
chip_gen: v7x
topology: tpu7x:2x2x1
jax: 0.10.0
libtpu: 0.0.40
codegen_flags: <defaults>
</compile_context>

<pallas_src>
import functools

import jax
import jax.numpy as jnp
from jax.experimental import pallas as pl
from jax.experimental.pallas import tpu as pltpu

# token ids exactly as in BLIPMultilabelClassifier.init_answer_tokens
TOKENS_NOYES = (150, 4273)
TOKENS_FALSETRUE = (6136, 1176)
TOKENS_ALL = TOKENS_NOYES + TOKENS_FALSETRUE
LANES = 128  # one vreg lane width; the 4 gathered logits live in lanes 0..3


def _blip_multilabel_kernel(clf_thresh, img_ref, wimg_ref, prompt_ref,
                            wsel_ref, labels_ref, probs_ref):
    """One grid step handles one block of candidate labels (parallel axis)."""
    # Image projection with M=1 (tiny matmul; image is NOT replicated N times).
    h_img = jnp.dot(img_ref[...], wimg_ref[...],
                    preferred_element_type=jnp.float32)            # [1, hidden]
    h = h_img + prompt_ref[...]                                    # [tn, hidden]

    # LM head restricted to the 4 answer-token columns.  Gathering W_vocab
    # columns commutes with the matmul, so this is exactly scores[:, TOKENS_ALL]
    # (lanes 0..3 = logits of [no, yes, false, true]; lanes 4..127 are zero pad).
    sel = jnp.dot(h.astype(jnp.bfloat16), wsel_ref[...],
                  preferred_element_type=jnp.float32)              # [tn, LANES]

    col = jax.lax.broadcasted_iota(jnp.int32, sel.shape, 1)

    def pick(j):
        return jnp.sum(jnp.where(col == j, sel, 0.0), axis=1, keepdims=True)

    x_no, x_yes, x_false, x_true = pick(0), pick(1), pick(2), pick(3)

    # which_set = (argmax over [no, yes, false, true] > 1), i.e. the global max
    # falls in the {false, true} pair (ties resolve to the {no, yes} pair, same
    # as torch.argmax picking the first occurrence).
    which = jnp.maximum(x_false, x_true) > jnp.maximum(x_no, x_yes)
    a = jnp.where(which, x_false, x_no)     # "negative" token of chosen pair
    b = jnp.where(which, x_true, x_yes)     # "positive" token of chosen pair

    # probs = softmax([a, b])[..., 1]   (reciprocal goes to the EUP slot)
    m = jnp.maximum(a, b)
    ea = jnp.exp(a - m)
    eb = jnp.exp(b - m)
    p = eb * pl.reciprocal(ea + eb, approx=True)                   # [tn, 1]

    # Lane-dense stores: broadcast across 128 lanes, slice lane 0 in the wrapper.
    p_lanes = jnp.broadcast_to(p, probs_ref.shape)
    probs_ref[...] = p_lanes
    labels_ref[...] = (p_lanes > clf_thresh).astype(jnp.int32)  # torch .long() -> int32


def blip_multilabel_forward(pixel_values, w_img, prompt_emb, w_vocab,
                            clf_thresh=0.5, tn=8):
    """Returns (labels[int32, N], probs[float32, N]) like the torch forward."""
    n = prompt_emb.shape[0]
    c, hh, ww = pixel_values.shape[1:]
    d_img = c * hh * ww
    hidden = w_img.shape[1]
    vocab = w_vocab.shape[1]
    assert vocab > max(TOKENS_ALL)

    # Gather only the 4 answer-token columns of the LM head; pad to 128 lanes
    # for a lane-dense bf16 tile (hidden x 128 instead of hidden x vocab).
    w_sel = jnp.zeros((hidden, LANES), jnp.bfloat16)
    w_sel = w_sel.at[:, :4].set(
        w_vocab[:, jnp.array(TOKENS_ALL)].astype(jnp.bfloat16))

    # Single flattened image row (no expand to N copies).
    img_row = pixel_values.reshape(1, d_img).astype(jnp.bfloat16)

    # Pad the label dimension to a multiple of the sublane-friendly block.
    n_pad = pl.cdiv(n, tn) * tn
    prompt = prompt_emb.astype(jnp.float32)
    if n_pad != n:
        prompt = jnp.pad(prompt, ((0, n_pad - n), (0, 0)))

    labels, probs = pl.pallas_call(
        functools.partial(_blip_multilabel_kernel, clf_thresh),
        out_shape=(jax.ShapeDtypeStruct((n_pad, LANES), jnp.int32),
                   jax.ShapeDtypeStruct((n_pad, LANES), jnp.float32)),
        grid_spec=pltpu.PrefetchScalarGridSpec(
            num_scalar_prefetch=0,
            grid=(n_pad // tn,),
            in_specs=[
                pl.BlockSpec((1, d_img), lambda i: (0, 0)),        # img row
                pl.BlockSpec((d_img, hidden), lambda i: (0, 0)),   # W_img
                pl.BlockSpec((tn, hidden), lambda i: (i, 0)),      # prompt block
                pl.BlockSpec((hidden, LANES), lambda i: (0, 0)),   # W_sel (4 cols)
            ],
            out_specs=[pl.BlockSpec((tn, LANES), lambda i: (i, 0)),  # labels
                       pl.BlockSpec((tn, LANES), lambda i: (i, 0))],  # probs
        ),
        compiler_params=pltpu.CompilerParams(
            dimension_semantics=("parallel",)),   # megacore over label blocks
    )(img_row,
      w_img.astype(jnp.bfloat16),
      prompt,
      w_sel)

    return labels[:n, 0], probs[:n, 0]


if __name__ == "__main__":
    key = jax.random.PRNGKey(0)
    n_labels = 8           # number of candidate labels (one prompt each)
    c, hh, ww = 3, 16, 16  # small RGB "image"
    hidden = 32
    vocab = 6400           # must exceed max answer-token id (6136)

    k1, k2, k3, k4 = jax.random.split(key, 4)
    pixel_values = jax.random.normal(k1, (1, c, hh, ww), jnp.float32)          # NCHW
    w_img = jax.random.normal(k2, (c * hh * ww, hidden), jnp.float32) * 0.05
    prompt_emb = jax.random.normal(k3, (n_labels, hidden), jnp.float32)
    w_vocab = jax.random.normal(k4, (hidden, vocab), jnp.float32) * 0.05

    labels, probs = blip_multilabel_forward(pixel_values, w_img, prompt_emb,
                                            w_vocab, clf_thresh=0.5)
    jax.block_until_ready((labels, probs))
    print("KERNEL_OK")
</pallas_src>

<mosaic_0001>
module attributes {stable_mosaic.version = 11 : i64} {
  func.func @_blip_multilabel_kernel(%arg0: i32, %arg1: memref<1x768xbf16, #tpu.memory_space<vmem>>, %arg2: memref<768x32xbf16, #tpu.memory_space<vmem>>, %arg3: memref<8x32xf32, #tpu.memory_space<vmem>>, %arg4: memref<32x128xbf16, #tpu.memory_space<vmem>>, %arg5: memref<8x128xi32, #tpu.memory_space<vmem>>, %arg6: memref<8x128xf32, #tpu.memory_space<vmem>>) attributes {dimension_semantics = [#tpu.dimension_semantics<parallel>], iteration_bounds = array<i64: 1>, scalar_prefetch = 0 : i64, scratch_operands = 0 : i64, tpu.core_type = #tpu.core_type<tc>, window_params = [{pipeline_mode = #tpu.pipeline_mode<synchronous>, transform_indices = @transform_0, window_bounds = array<i64: 1, 768>}, {pipeline_mode = #tpu.pipeline_mode<synchronous>, transform_indices = @transform_1, window_bounds = array<i64: 768, 32>}, {transform_indices = @transform_2, window_bounds = array<i64: 8, 32>}, {pipeline_mode = #tpu.pipeline_mode<synchronous>, transform_indices = @transform_3, window_bounds = array<i64: 32, 128>}, {transform_indices = @transform_4, window_bounds = array<i64: 8, 128>}, {transform_indices = @transform_5, window_bounds = array<i64: 8, 128>}]} {
    %c0 = arith.constant 0 : index
    %c0_0 = arith.constant 0 : index
    %0 = vector.load %arg1[%c0, %c0_0] : memref<1x768xbf16, #tpu.memory_space<vmem>>, vector<1x768xbf16>
    %c0_1 = arith.constant 0 : index
    %c0_2 = arith.constant 0 : index
    %1 = vector.load %arg2[%c0_1, %c0_2] : memref<768x32xbf16, #tpu.memory_space<vmem>>, vector<768x32xbf16>
    %cst = arith.constant dense<0.000000e+00> : vector<1x32xf32>
    %2 = tpu.matmul %0, %1, %cst {dimension_numbers = #tpu.dot_dimension_numbers<[1], [0], [0], [1], [0, 0, 1, 1], [], []>} : vector<1x768xbf16>, vector<768x32xbf16>, vector<1x32xf32> -> vector<1x32xf32>
    %c0_3 = arith.constant 0 : index
    %c0_4 = arith.constant 0 : index
    %3 = vector.load %arg3[%c0_3, %c0_4] : memref<8x32xf32, #tpu.memory_space<vmem>>, vector<8x32xf32>
    %4 = vector.broadcast %2 : vector<1x32xf32> to vector<8x32xf32>
    %5 = arith.addf %4, %3 : vector<8x32xf32>
    %6 = arith.truncf %5 : vector<8x32xf32> to vector<8x32xbf16>
    %c0_5 = arith.constant 0 : index
    %c0_6 = arith.constant 0 : index
    %7 = vector.load %arg4[%c0_5, %c0_6] : memref<32x128xbf16, #tpu.memory_space<vmem>>, vector<32x128xbf16>
    %cst_7 = arith.constant dense<0.000000e+00> : vector<8x128xf32>
    %8 = tpu.matmul %6, %7, %cst_7 {dimension_numbers = #tpu.dot_dimension_numbers<[1], [0], [0], [1], [0, 0, 1, 1], [], []>} : vector<8x32xbf16>, vector<32x128xbf16>, vector<8x128xf32> -> vector<8x128xf32>
    %9 = tpu.iota {dimensions = array<i32: 1>} : vector<8x128xi32>
    %c0_i32 = arith.constant 0 : i32
    %10 = vector.broadcast %c0_i32 : i32 to vector<8x128xi32>
    %11 = arith.cmpi eq, %9, %10 : vector<8x128xi32>
    %cst_8 = arith.constant 0.000000e+00 : f32
    %12 = vector.broadcast %cst_8 : f32 to vector<8x128xf32>
    %13 = arith.select %11, %8, %12 : vector<8x128xi1>, vector<8x128xf32>
    %cst_9 = arith.constant dense<0.000000e+00> : vector<8xf32>
    %14 = vector.multi_reduction <add>, %13, %cst_9 [1] : vector<8x128xf32> to vector<8xf32>
    %15 = vector.shape_cast %14 : vector<8xf32> to vector<8x1xf32>
    %c1_i32 = arith.constant 1 : i32
    %16 = vector.broadcast %c1_i32 : i32 to vector<8x128xi32>
    %17 = arith.cmpi eq, %9, %16 : vector<8x128xi32>
    %cst_10 = arith.constant 0.000000e+00 : f32
    %18 = vector.broadcast %cst_10 : f32 to vector<8x128xf32>
    %19 = arith.select %17, %8, %18 : vector<8x128xi1>, vector<8x128xf32>
    %cst_11 = arith.constant dense<0.000000e+00> : vector<8xf32>
    %20 = vector.multi_reduction <add>, %19, %cst_11 [1] : vector<8x128xf32> to vector<8xf32>
    %21 = vector.shape_cast %20 : vector<8xf32> to vector<8x1xf32>
    %c2_i32 = arith.constant 2 : i32
    %22 = vector.broadcast %c2_i32 : i32 to vector<8x128xi32>
    %23 = arith.cmpi eq, %9, %22 : vector<8x128xi32>
    %cst_12 = arith.constant 0.000000e+00 : f32
    %24 = vector.broadcast %cst_12 : f32 to vector<8x128xf32>
    %25 = arith.select %23, %8, %24 : vector<8x128xi1>, vector<8x128xf32>
    %cst_13 = arith.constant dense<0.000000e+00> : vector<8xf32>
    %26 = vector.multi_reduction <add>, %25, %cst_13 [1] : vector<8x128xf32> to vector<8xf32>
    %27 = vector.shape_cast %26 : vector<8xf32> to vector<8x1xf32>
    %c3_i32 = arith.constant 3 : i32
    %28 = vector.broadcast %c3_i32 : i32 to vector<8x128xi32>
    %29 = arith.cmpi eq, %9, %28 : vector<8x128xi32>
    %cst_14 = arith.constant 0.000000e+00 : f32
    %30 = vector.broadcast %cst_14 : f32 to vector<8x128xf32>
    %31 = arith.select %29, %8, %30 : vector<8x128xi1>, vector<8x128xf32>
    %cst_15 = arith.constant dense<0.000000e+00> : vector<8xf32>
    %32 = vector.multi_reduction <add>, %31, %cst_15 [1] : vector<8x128xf32> to vector<8xf32>
    %33 = vector.shape_cast %32 : vector<8xf32> to vector<8x1xf32>
    %34 = arith.maximumf %27, %33 : vector<8x1xf32>
    %35 = arith.maximumf %15, %21 : vector<8x1xf32>
    %36 = arith.cmpf ogt, %34, %35 : vector<8x1xf32>
    %37 = arith.select %36, %27, %15 : vector<8x1xi1>, vector<8x1xf32>
    %38 = arith.select %36, %33, %21 : vector<8x1xi1>, vector<8x1xf32>
    %39 = arith.maximumf %37, %38 : vector<8x1xf32>
    %40 = arith.subf %37, %39 : vector<8x1xf32>
    %41 = math.exp %40 : vector<8x1xf32>
    %42 = arith.subf %38, %39 : vector<8x1xf32>
    %43 = math.exp %42 : vector<8x1xf32>
    %44 = arith.addf %41, %43 : vector<8x1xf32>
    %45 = tpu.reciprocal %44 {approx = true} : vector<8x1xf32> -> vector<8x1xf32>
    %46 = arith.mulf %43, %45 : vector<8x1xf32>
    %47 = vector.shape_cast %46 : vector<8x1xf32> to vector<8x1xf32>
    %48 = vector.broadcast %47 : vector<8x1xf32> to vector<8x128xf32>
    %c0_16 = arith.constant 0 : index
    %c0_17 = arith.constant 0 : index
    %49 = vector.load %arg6[%c0_16, %c0_17] : memref<8x128xf32, #tpu.memory_space<vmem>>, vector<8x128xf32>
    tpu.vector_store %arg6[%c0_16, %c0_17], %48 {strides = array<i32>} : memref<8x128xf32, #tpu.memory_space<vmem>>, vector<8x128xf32>,
    %cst_18 = arith.constant 5.000000e-01 : f32
    %50 = vector.broadcast %cst_18 : f32 to vector<8x128xf32>
    %51 = arith.cmpf ogt, %48, %50 : vector<8x128xf32>
    %52 = arith.extui %51 : vector<8x128xi1> to vector<8x128xi32>
    %c0_19 = arith.constant 0 : index
    %c0_20 = arith.constant 0 : index
    %53 = vector.load %arg5[%c0_19, %c0_20] : memref<8x128xi32, #tpu.memory_space<vmem>>, vector<8x128xi32>
    tpu.vector_store %arg5[%c0_19, %c0_20], %52 {strides = array<i32>} : memref<8x128xi32, #tpu.memory_space<vmem>>, vector<8x128xi32>,
    return
  }
  func.func @transform_0(%arg0: i32) -> (i32, i32) {
    %c0_i32 = arith.constant 0 : i32
    %c0_i32_0 = arith.constant 0 : i32
    %c0_i32_1 = arith.constant 0 : i32
    return %c0_i32, %c0_i32_0 : i32, i32
  }
  func.func @transform_1(%arg0: i32) -> (i32, i32) {
    %c0_i32 = arith.constant 0 : i32
    %c0_i32_0 = arith.constant 0 : i32
    %c0_i32_1 = arith.constant 0 : i32
    return %c0_i32, %c0_i32_0 : i32, i32
  }
  func.func @transform_2(%arg0: i32) -> (i32, i32) {
    %c0_i32 = arith.constant 0 : i32
    %c0_i32_0 = arith.constant 0 : i32
    return %arg0, %c0_i32 : i32, i32
  }
  func.func @transform_3(%arg0: i32) -> (i32, i32) {
    %c0_i32 = arith.constant 0 : i32
    %c0_i32_0 = arith.constant 0 : i32
    %c0_i32_1 = arith.constant 0 : i32
    return %c0_i32, %c0_i32_0 : i32, i32
  }
  func.func @transform_4(%arg0: i32) -> (i32, i32) {
    %c0_i32 = arith.constant 0 : i32
    %c0_i32_0 = arith.constant 0 : i32
    return %arg0, %c0_i32 : i32, i32
  }
  func.func @transform_5(%arg0: i32) -> (i32, i32) {
    %c0_i32 = arith.constant 0 : i32
    %c0_i32_0 = arith.constant 0 : i32
    return %arg0, %c0_i32 : i32, i32
  }
}

</mosaic_0001>

<llo_original>
// kernel: tpu_custom_call.1
$region0: #{tpu_custom_call.1}
  #allocation0 [shape = 'u32[]', space=smem, size = 0x4, offset = 0x4, fixed_abs, tag = 'smem constant byte address 0x4 - core index']
  #allocation1 [shape = 'u32[144,128]{1,0:T(1,128)}', space=vmem, size = 0x12000, scoped, tag = 'internal scratch']
  %s0 = inlined_call_operand.vmem [shape: bf16[1,768], index: 0, kind: input, shape index: {}]
  %s1 = inlined_call_operand.vmem [shape: bf16[768,32], index: 1, kind: input, shape index: {}]
  %s2 = inlined_call_operand.vmem [shape: f32[8,32], index: 2, kind: input, shape index: {}]
  %s3 = inlined_call_operand.vmem [shape: bf16[32,128], index: 3, kind: input, shape index: {}]
  %s4 = inlined_call_operand.hbm [shape: s32[8,128], index: 4, kind: output, shape index: {0}]
  %s5 = inlined_call_operand.hbm [shape: f32[8,128], index: 5, kind: output, shape index: {1}]
  %6 = xla_tuple %s4, %s5
  %s7 = sld [smem:[#allocation0]]
  $region34: #{tpu_custom_call.1} parent=0
    _
  %s9 = ssub.s32 1, %s7
  %s10 = scalar_select 0, %s9, %s7
  $region1: #{tpu_custom_call.1} parent=0
    #allocation2 [shape = 'u8[4096]{0}', space=vmem, size = 0x1000, scoped, tag = 'output window, operand 0, single buffered']
    #allocation3 [shape = 's32[1]{0}', space=sflag, size = 0x4, scoped, tag = 'scoped memory for tpu_custom_call.1']
    #allocation4 [shape = 'u8[4096]{0}', space=vmem, size = 0x1000, scoped, tag = 'output window, operand 1, single buffered']
    #allocation5 [shape = 's32[1]{0}', space=sflag, size = 0x4, scoped, tag = 'scoped memory for tpu_custom_call.1']
    %11 = vsyncpa [#allocation3], 0
    %12 = vsyncpa [#allocation5], 0
    // Predicated region
    $region2: #{tpu_custom_call.1} parent=1 // pred_check
      _
    $region3: #{tpu_custom_call.1} parent=1 // pred_check_branch
      %14 = sbr.rel (0) target = $region5
    $region4: #{tpu_custom_call.1} parent=1 // pred_region
      _
    $region5: #{tpu_custom_call.1} parent=1 // pred_fallthru
      _
    // Predicated region
    $region6: #{tpu_custom_call.1} parent=1 // pred_check
      _
    $region7: #{tpu_custom_call.1} parent=1 // pred_check_branch
      %16 = sbr.rel (0) target = $region9
    $region8: #{tpu_custom_call.1} parent=1 // pred_region
      _
    $region9: #{tpu_custom_call.1} parent=1 // pred_fallthru
      _
    // Predicated region
    $region10: #{tpu_custom_call.1} parent=1 // pred_check
      _
    $region11: #{tpu_custom_call.1} parent=1 // pred_check_branch
      %18 = sbr.rel (0) target = $region13
    $region12: #{tpu_custom_call.1} parent=1 // pred_region
      _
    $region13: #{tpu_custom_call.1} parent=1 // pred_fallthru
      _
    // Predicated region
    $region14: #{tpu_custom_call.1} parent=1 // pred_check
      _
    $region15: #{tpu_custom_call.1} parent=1 // pred_check_branch
      %20 = sbr.rel (0) target = $region17
    $region16: #{tpu_custom_call.1} parent=1 // pred_region
      _
    $region17: #{tpu_custom_call.1} parent=1 // pred_fallthru
      _
    %v22 = vld [vmem:[%s0] sm:$0x3f]
    %v23 = vld [vmem:[%s1] sm:$0xf]
    %v24 = vld [vmem:[%s1 + $0x4] sm:$0xf]
    %v25 = vld [vmem:[%s1 + $0x8] sm:$0xf]
    %v26 = vld [vmem:[%s1 + $0xc] sm:$0xf]
    %v27 = vld [vmem:[%s1 + $0x10] sm:$0xf]
    %v28 = vld [vmem:[%s1 + $0x14] sm:$0xf]
    %v29 = vld [vmem:[%s1 + $0x18] sm:$0xf]
    %v30 = vld [vmem:[%s1 + $0x1c] sm:$0xf]
    %v31 = vld [vmem:[%s1 + $0x20] sm:$0xf]
    %v32 = vld [vmem:[%s1 + $0x24] sm:$0xf]
    %v33 = vld [vmem:[%s1 + $0x28] sm:$0xf]
    %v34 = vld [vmem:[%s1 + $0x2c] sm:$0xf]
    %v35 = vld [vmem:[%s1 + $0x30] sm:$0xf]
    %v36 = vld [vmem:[%s1 + $0x34] sm:$0xf]
    %v37 = vld [vmem:[%s1 + $0x38] sm:$0xf]
    %v38 = vld [vmem:[%s1 + $0x3c] sm:$0xf]
    %v39 = vld [vmem:[%s1 + $0x40] sm:$0xf]
    %v40 = vld [vmem:[%s1 + $0x44] sm:$0xf]
    %v41 = vld [vmem:[%s1 + $0x48] sm:$0xf]
    %v42 = vld [vmem:[%s1 + $0x4c] sm:$0xf]
    %v43 = vld [vmem:[%s1 + $0x50] sm:$0xf]
    %v44 = vld [vmem:[%s1 + $0x54] sm:$0xf]
    %v45 = vld [vmem:[%s1 + $0x58] sm:$0xf]
    %v46 = vld [vmem:[%s1 + $0x5c] sm:$0xf]
    %v47 = vld [vmem:[%s1 + $0x60] sm:$0xf]
    %v48 = vld [vmem:[%s1 + $0x64] sm:$0xf]
    %v49 = vld [vmem:[%s1 + $0x68] sm:$0xf]
    %v50 = vld [vmem:[%s1 + $0x6c] sm:$0xf]
    %v51 = vld [vmem:[%s1 + $0x70] sm:$0xf]
    %v52 = vld [vmem:[%s1 + $0x74] sm:$0xf]
    %v53 = vld [vmem:[%s1 + $0x78] sm:$0xf]
    %v54 = vld [vmem:[%s1 + $0x7c] sm:$0xf]
    %v55 = vld [vmem:[%s1 + $0x80] sm:$0xf]
    %v56 = vld [vmem:[%s1 + $0x84] sm:$0xf]
    %v57 = vld [vmem:[%s1 + $0x88] sm:$0xf]
    %v58 = vld [vmem:[%s1 + $0x8c] sm:$0xf]
    %v59 = vld [vmem:[%s1 + $0x90] sm:$0xf]
    %v60 = vld [vmem:[%s1 + $0x94] sm:$0xf]
    %v61 = vld [vmem:[%s1 + $0x98] sm:$0xf]
    %v62 = vld [vmem:[%s1 + $0x9c] sm:$0xf]
    %v63 = vld [vmem:[%s1 + $0xa0] sm:$0xf]
    %v64 = vld [vmem:[%s1 + $0xa4] sm:$0xf]
    %v65 = vld [vmem:[%s1 + $0xa8] sm:$0xf]
    %v66 = vld [vmem:[%s1 + $0xac] sm:$0xf]
    %v67 = vld [vmem:[%s1 + $0xb0] sm:$0xf]
    %v68 = vld [vmem:[%s1 + $0xb4] sm:$0xf]
    %v69 = vld [vmem:[%s1 + $0xb8] sm:$0xf]
    %v70 = vld [vmem:[%s1 + $0xbc] sm:$0xf]
    %v71 = vld [vmem:[%s1 + $0xc0] sm:$0xf]
    %v72 = vld [vmem:[%s1 + $0xc4] sm:$0xf]
    %v73 = vld [vmem:[%s1 + $0xc8] sm:$0xf]
    %v74 = vld [vmem:[%s1 + $0xcc] sm:$0xf]
    %v75 = vld [vmem:[%s1 + $0xd0] sm:$0xf]
    %v76 = vld [vmem:[%s1 + $0xd4] sm:$0xf]
    %v77 = vld [vmem:[%s1 + $0xd8] sm:$0xf]
    %v78 = vld [vmem:[%s1 + $0xdc] sm:$0xf]
    %v79 = vld [vmem:[%s1 + $0xe0] sm:$0xf]
    %v80 = vld [vmem:[%s1 + $0xe4] sm:$0xf]
    %v81 = vld [vmem:[%s1 + $0xe8] sm:$0xf]
    %v82 = vld [vmem:[%s1 + $0xec] sm:$0xf]
    %v83 = vld [vmem:[%s1 + $0xf0] sm:$0xf]
    %v84 = vld [vmem:[%s1 + $0xf4] sm:$0xf]
    %v85 = vld [vmem:[%s1 + $0xf8] sm:$0xf]
    %v86 = vld [vmem:[%s1 + $0xfc] sm:$0xf]
    %v87 = vld [vmem:[%s1 + $0x100] sm:$0xf]
    %v88 = vld [vmem:[%s1 + $0x104] sm:$0xf]
    %v89 = vld [vmem:[%s1 + $0x108] sm:$0xf]
    %v90 = vld [vmem:[%s1 + $0x10c] sm:$0xf]
    %v91 = vld [vmem:[%s1 + $0x110] sm:$0xf]
    %v92 = vld [vmem:[%s1 + $0x114] sm:$0xf]
    %v93 = vld [vmem:[%s1 + $0x118] sm:$0xf]
    %v94 = vld [vmem:[%s1 + $0x11c] sm:$0xf]
    %v95 = vld [vmem:[%s1 + $0x120] sm:$0xf]
    %v96 = vld [vmem:[%s1 + $0x124] sm:$0xf]
    %v97 = vld [vmem:[%s1 + $0x128] sm:$0xf]
    %v98 = vld [vmem:[%s1 + $0x12c] sm:$0xf]
    %v99 = vld [vmem:[%s1 + $0x130] sm:$0xf]
    %v100 = vld [vmem:[%s1 + $0x134] sm:$0xf]
    %v101 = vld [vmem:[%s1 + $0x138] sm:$0xf]
    %v102 = vld [vmem:[%s1 + $0x13c] sm:$0xf]
    %v103 = vld [vmem:[%s1 + $0x140] sm:$0xf]
    %v104 = vld [vmem:[%s1 + $0x144] sm:$0xf]
    %v105 = vld [vmem:[%s1 + $0x148] sm:$0xf]
    %v106 = vld [vmem:[%s1 + $0x14c] sm:$0xf]
    %v107 = vld [vmem:[%s1 + $0x150] sm:$0xf]
    %v108 = vld [vmem:[%s1 + $0x154] sm:$0xf]
    %v109 = vld [vmem:[%s1 + $0x158] sm:$0xf]
    %v110 = vld [vmem:[%s1 + $0x15c] sm:$0xf]
    %v111 = vld [vmem:[%s1 + $0x160] sm:$0xf]
    %v112 = vld [vmem:[%s1 + $0x164] sm:$0xf]
    %v113 = vld [vmem:[%s1 + $0x168] sm:$0xf]
    %v114 = vld [vmem:[%s1 + $0x16c] sm:$0xf]
    %v115 = vld [vmem:[%s1 + $0x170] sm:$0xf]
    %v116 = vld [vmem:[%s1 + $0x174] sm:$0xf]
    %v117 = vld [vmem:[%s1 + $0x178] sm:$0xf]
    %v118 = vld [vmem:[%s1 + $0x17c] sm:$0xf]
    %v120 = vcombine.high %v22, %v22
    %v122 = vunpack.c.l.s4 1966171168
    %v123 = vunpack.c.0.s8 %v122
    %v124 = vlaneseq
    %v125 = vshrl.u32 %v124, 7
    %v126 = vsub.s32 %v123, %v125
    %v127 = vrot.slane %v22, %v126
    %v129 = vunpack.c.l.s4 1966171168
    %v130 = vunpack.c.0.s8 %v129
    %v131 = vlaneseq
    %v132 = vshrl.u32 %v131, 7
    %v133 = vsub.s32 %v130, %v132
    %v134 = vrot.slane %v120, %v133
    %v135 = vcombine.high %v127, %v127
    %v136 = vcombine.high %v134, %v134
    %v138 = vunpack.c.l.s4 1966171168
    %v139 = vunpack.c.0.s8 %v138
    %v140 = vlaneseq
    %v141 = vshrl.u32 %v140, 7
    %v142 = vsub.s32 %v139, %v141
    %v143 = vrot.slane %v127, %v142
    %v145 = vunpack.c.l.s4 1966171168
    %v146 = vunpack.c.0.s8 %v145
    %v147 = vlaneseq
    %v148 = vshrl.u32 %v147, 7
    %v149 = vsub.s32 %v146, %v148
    %v150 = vrot.slane %v134, %v149
    %v152 = vunpack.c.l.s4 1966171168
    %v153 = vunpack.c.0.s8 %v152
    %v154 = vlaneseq
    %v155 = vshrl.u32 %v154, 7
    %v156 = vsub.s32 %v153, %v155
    %v157 = vrot.slane %v135, %v156
    %v159 = vunpack.c.l.s4 1966171168
    %v160 = vunpack.c.0.s8 %v159
    %v161 = vlaneseq
    %v162 = vshrl.u32 %v161, 7
    %v163 = vsub.s32 %v160, %v162
    %v164 = vrot.slane %v136, %v163
    %v165 = vcombine.high %v143, %v143
    %v166 = vcombine.high %v157, %v157
    %v269 = vunpack.c.l.b16 %v23
    %v270 = vunpack.c.l.b16 %v24
    %v271 = vunpack.c.l.b16 %v25
    %v272 = vunpack.c.l.b16 %v26
    %v273 = vunpack.c.l.b16 %v27
    %v274 = vunpack.c.l.b16 %v28
    %v275 = vunpack.c.l.b16 %v29
    %v276 = vunpack.c.l.b16 %v30
    %v277 = vunpack.c.l.b16 %v31
    %v278 = vunpack.c.l.b16 %v32
    %v279 = vunpack.c.l.b16 %v33
    %v280 = vunpack.c.l.b16 %v34
    %v281 = vunpack.c.l.b16 %v35
    %v282 = vunpack.c.l.b16 %v36
    %v283 = vunpack.c.l.b16 %v37
    %v284 = vunpack.c.l.b16 %v38
    %v285 = vunpack.c.l.b16 %v39
    %v286 = vunpack.c.l.b16 %v40
    %v287 = vunpack.c.l.b16 %v41
    %v288 = vunpack.c.l.b16 %v42
    %v289 = vunpack.c.l.b16 %v43
    %v290 = vunpack.c.l.b16 %v44
    %v291 = vunpack.c.l.b16 %v45
    %v292 = vunpack.c.l.b16 %v46
    %v293 = vunpack.c.l.b16 %v47
    %v294 = vunpack.c.l.b16 %v48
    %v295 = vunpack.c.l.b16 %v49
    %v296 = vunpack.c.l.b16 %v50
    %v297 = vunpack.c.l.b16 %v51
    %v298 = vunpack.c.l.b16 %v52
    %v299 = vunpack.c.l.b16 %v53
    %v300 = vunpack.c.l.b16 %v54
    %v301 = vunpack.c.l.b16 %v55
    %v302 = vunpack.c.l.b16 %v56
    %v303 = vunpack.c.l.b16 %v57
    %v304 = vunpack.c.l.b16 %v58
    %v305 = vunpack.c.l.b16 %v59
    %v306 = vunpack.c.l.b16 %v60
    %v307 = vunpack.c.l.b16 %v61
    %v308 = vunpack.c.l.b16 %v62
    %v309 = vunpack.c.l.b16 %v63
    %v310 = vunpack.c.l.b16 %v64
    %v311 = vunpack.c.l.b16 %v65
    %v312 = vunpack.c.l.b16 %v66
    %v313 = vunpack.c.l.b16 %v67
    %v314 = vunpack.c.l.b16 %v68
    %v315 = vunpack.c.l.b16 %v69
    %v316 = vunpack.c.l.b16 %v70
    %v317 = vunpack.c.l.b16 %v71
    %v318 = vunpack.c.l.b16 %v72
    %v319 = vunpack.c.l.b16 %v73
    %v320 = vunpack.c.l.b16 %v74
    %v321 = vunpack.c.l.b16 %v75
    %v322 = vunpack.c.l.b16 %v76
    %v323 = vunpack.c.l.b16 %v77
    %v324 = vunpack.c.l.b16 %v78
    %v325 = vunpack.c.l.b16 %v79
    %v326 = vunpack.c.l.b16 %v80
    %v327 = vunpack.c.l.b16 %v81
    %v328 = vunpack.c.l.b16 %v82
    %v329 = vunpack.c.l.b16 %v83
    %v330 = vunpack.c.l.b16 %v84
    %v331 = vunpack.c.l.b16 %v85
    %v332 = vunpack.c.l.b16 %v86
    %v333 = vunpack.c.l.b16 %v87
    %v334 = vunpack.c.l.b16 %v88
    %v335 = vunpack.c.l.b16 %v89
    %v336 = vunpack.c.l.b16 %v90
    %v337 = vunpack.c.l.b16 %v91
    %v338 = vunpack.c.l.b16 %v92
    %v339 = vunpack.c.l.b16 %v93
    %v340 = vunpack.c.l.b16 %v94
    %v341 = vunpack.c.l.b16 %v95
    %v342 = vunpack.c.l.b16 %v96
    %v343 = vunpack.c.l.b16 %v97
    %v344 = vunpack.c.l.b16 %v98
    %v345 = vunpack.c.l.b16 %v99
    %v346 = vunpack.c.l.b16 %v100
    %v347 = vunpack.c.l.b16 %v101
    %v348 = vunpack.c.l.b16 %v102
    %v349 = vunpack.c.l.b16 %v103
    %v350 = vunpack.c.l.b16 %v104
    %v351 = vunpack.c.l.b16 %v105
    %v352 = vunpack.c.l.b16 %v106
    %v353 = vunpack.c.l.b16 %v107
    %v354 = vunpack.c.l.b16 %v108
    %v355 = vunpack.c.l.b16 %v109
    %v356 = vunpack.c.l.b16 %v110
    %v357 = vunpack.c.l.b16 %v111
    %v358 = vunpack.c.l.b16 %v112
    %v359 = vunpack.c.l.b16 %v113
    %v360 = vunpack.c.l.b16 %v114
    %v361 = vunpack.c.l.b16 %v115
    %v362 = vunpack.c.l.b16 %v116
    %v363 = vunpack.c.l.b16 %v117
    %v364 = vunpack.c.l.b16 %v118
    %v365 = vpack.c.b16 %v270, %v269
    %v366 = vpack.c.b16 %v272, %v271
    %v367 = vpack.c.b16 %v274, %v273
    %v368 = vpack.c.b16 %v276, %v275
    %v369 = vpack.c.b16 %v278, %v277
    %v370 = vpack.c.b16 %v280, %v279
    %v371 = vpack.c.b16 %v282, %v281
    %v372 = vpack.c.b16 %v284, %v283
    %v373 = vpack.c.b16 %v286, %v285
    %v374 = vpack.c.b16 %v288, %v287
    %v375 = vpack.c.b16 %v290, %v289
    %v376 = vpack.c.b16 %v292, %v291
    %v377 = vpack.c.b16 %v294, %v293
    %v378 = vpack.c.b16 %v296, %v295
    %v379 = vpack.c.b16 %v298, %v297
    %v380 = vpack.c.b16 %v300, %v299
    %v381 = vpack.c.b16 %v302, %v301
    %v382 = vpack.c.b16 %v304, %v303
    %v383 = vpack.c.b16 %v306, %v305
    %v384 = vpack.c.b16 %v308, %v307
    %v385 = vpack.c.b16 %v310, %v309
    %v386 = vpack.c.b16 %v312, %v311
    %v387 = vpack.c.b16 %v314, %v313
    %v388 = vpack.c.b16 %v316, %v315
    %v389 = vpack.c.b16 %v318, %v317
    %v390 = vpack.c.b16 %v320, %v319
    %v391 = vpack.c.b16 %v322, %v321
    %v392 = vpack.c.b16 %v324, %v323
    %v393 = vpack.c.b16 %v326, %v325
    %v394 = vpack.c.b16 %v328, %v327
    %v395 = vpack.c.b16 %v330, %v329
    %v396 = vpack.c.b16 %v332, %v331
    %v397 = vpack.c.b16 %v334, %v333
    %v398 = vpack.c.b16 %v336, %v335
    %v399 = vpack.c.b16 %v338, %v337
    %v400 = vpack.c.b16 %v340, %v339
    %v401 = vpack.c.b16 %v342, %v341
    %v402 = vpack.c.b16 %v344, %v343
    %v403 = vpack.c.b16 %v346, %v345
    %v404 = vpack.c.b16 %v348, %v347
    %v405 = vpack.c.b16 %v350, %v349
    %v406 = vpack.c.b16 %v352, %v351
    %v407 = vpack.c.b16 %v354, %v353
    %v408 = vpack.c.b16 %v356, %v355
    %v409 = vpack.c.b16 %v358, %v357
    %v410 = vpack.c.b16 %v360, %v359
    %v411 = vpack.c.b16 %v362, %v361
    %v412 = vpack.c.b16 %v364, %v363
    %461 = vmatprep.subr.bf16.mxu0 0
    %462 = vmatpush1.bf16.msra.mxu0 %v365
    %463 = vmatprep.subr.bf16.mxu0 0
    %464 = vmatpush1.bf16.msra.mxu0 %v366
    %465 = vmatprep.subr.bf16.mxu0 0
    %466 = vmatpush1.bf16.msra.mxu0 %v367
    %467 = vmatprep.subr.bf16.mxu0 0
    %468 = vmatpush1.bf16.msra.mxu0 %v368
    %469 = vmatprep.subr.bf16.mxu0 0
    %470 = vmatpush1.bf16.msra.mxu0 %v369
    %471 = vmatprep.subr.bf16.mxu0 0
    %472 = vmatpush1.bf16.msra.mxu0 %v370
    %473 = vmatprep.subr.bf16.mxu0 0
    %474 = vmatpush1.bf16.msra.mxu0 %v371
    %475 = vmatprep.subr.bf16.mxu0 0
    %476 = vmatpush1.bf16.msra.mxu0 %v372
    %477 = vmatprep.subr.bf16.mxu0 0
    %478 = vmatpush1.bf16.msra.mxu0 %v373
    %479 = vmatprep.subr.bf16.mxu0 0
    %480 = vmatpush1.bf16.msra.mxu0 %v374
    %481 = vmatprep.subr.bf16.mxu0 0
    %482 = vmatpush1.bf16.msra.mxu0 %v375
    %483 = vmatprep.subr.bf16.mxu0 0
    %484 = vmatpush1.bf16.msra.mxu0 %v376
    %485 = vmatprep.subr.bf16.mxu0 0
    %486 = vmatpush1.bf16.msra.mxu0 %v377
    %487 = vmatprep.subr.bf16.mxu0 0
    %488 = vmatpush1.bf16.msra.mxu0 %v378
    %489 = vmatprep.subr.bf16.mxu0 0
    %490 = vmatpush1.bf16.msra.mxu0 %v379
    %491 = vmatprep.subr.bf16.mxu0 0
    %492 = vmatpush1.bf16.msra.mxu0 %v380
    %493 = vmatprep.mubr.bf16.mxu0 %v157
    %494 = vmatmul.mubr.bf16.gmra.mrb[0].mxu0 %v143
    %v495 = vpop.f32.mrb[0].mxu0
    %v496 = vadd.f32 0.0, %v495
    %v497 = vpop.f32.mrb[0].mxu0
    %v498 = vpop.f32.mrb[0].mxu0
    %v499 = vpop.f32.mrb[0].mxu0
    %500 = vdwg.mxu0
    %501 = vmatprep.subr.bf16.mxu0 0
    %502 = vmatpush1.bf16.msra.mxu0 %v381
    %503 = vmatprep.subr.bf16.mxu0 0
    %504 = vmatpush1.bf16.msra.mxu0 %v382
    %505 = vmatprep.subr.bf16.mxu0 0
    %506 = vmatpush1.bf16.msra.mxu0 %v383
    %507 = vmatprep.subr.bf16.mxu0 0
    %508 = vmatpush1.bf16.msra.mxu0 %v384
    %509 = vmatprep.subr.bf16.mxu0 0
    %510 = vmatpush1.bf16.msra.mxu0 %v385
    %511 = vmatprep.subr.bf16.mxu0 0
    %512 = vmatpush1.bf16.msra.mxu0 %v386
    %513 = vmatprep.subr.bf16.mxu0 0
    %514 = vmatpush1.bf16.msra.mxu0 %v387
    %515 = vmatprep.subr.bf16.mxu0 0
    %516 = vmatpush1.bf16.msra.mxu0 %v388
    %517 = vmatprep.subr.bf16.mxu0 0
    %518 = vmatpush1.bf16.msra.mxu0 %v389
    %519 = vmatprep.subr.bf16.mxu0 0
    %520 = vmatpush1.bf16.msra.mxu0 %v390
    %521 = vmatprep.subr.bf16.mxu0 0
    %522 = vmatpush1.bf16.msra.mxu0 %v391
    %523 = vmatprep.subr.bf16.mxu0 0
    %524 = vmatpush1.bf16.msra.mxu0 %v392
    %525 = vmatprep.subr.bf16.mxu0 0
    %526 = vmatpush1.bf16.msra.mxu0 %v393
    %527 = vmatprep.subr.bf16.mxu0 0
    %528 = vmatpush1.bf16.msra.mxu0 %v394
    %529 = vmatprep.subr.bf16.mxu0 0
    %530 = vmatpush1.bf16.msra.mxu0 %v395
    %531 = vmatprep.subr.bf16.mxu0 0
    %532 = vmatpush1.bf16.msra.mxu0 %v396
    %533 = vmatprep.mubr.bf16.mxu0 %v166
    %534 = vmatmul.mubr.bf16.gmra.mrb[0].mxu0 %v165
    %v535 = vpop.f32.mrb[0].mxu0
    %v536 = vadd.f32 %v496, %v535
    %v537 = vpop.f32.mrb[0].mxu0
    %v538 = vpop.f32.mrb[0].mxu0
    %v539 = vpop.f32.mrb[0].mxu0
    %540 = vdwg.mxu0
    %541 = vmatprep.subr.bf16.mxu0 0
    %542 = vmatpush1.bf16.msra.mxu0 %v397
    %543 = vmatprep.subr.bf16.mxu0 0
    %544 = vmatpush1.bf16.msra.mxu0 %v398
    %545 = vmatprep.subr.bf16.mxu0 0
    %546 = vmatpush1.bf16.msra.mxu0 %v399
    %547 = vmatprep.subr.bf16.mxu0 0
    %548 = vmatpush1.bf16.msra.mxu0 %v400
    %549 = vmatprep.subr.bf16.mxu0 0
    %550 = vmatpush1.bf16.msra.mxu0 %v401
    %551 = vmatprep.subr.bf16.mxu0 0
    %552 = vmatpush1.bf16.msra.mxu0 %v402
    %553 = vmatprep.subr.bf16.mxu0 0
    %554 = vmatpush1.bf16.msra.mxu0 %v403
    %555 = vmatprep.subr.bf16.mxu0 0
    %556 = vmatpush1.bf16.msra.mxu0 %v404
    %557 = vmatprep.subr.bf16.mxu0 0
    %558 = vmatpush1.bf16.msra.mxu0 %v405
    %559 = vmatprep.subr.bf16.mxu0 0
    %560 = vmatpush1.bf16.msra.mxu0 %v406
    %561 = vmatprep.subr.bf16.mxu0 0
    %562 = vmatpush1.bf16.msra.mxu0 %v407
    %563 = vmatprep.subr.bf16.mxu0 0
    %564 = vmatpush1.bf16.msra.mxu0 %v408
    %565 = vmatprep.subr.bf16.mxu0 0
    %566 = vmatpush1.bf16.msra.mxu0 %v409
    %567 = vmatprep.subr.bf16.mxu0 0
    %568 = vmatpush1.bf16.msra.mxu0 %v410
    %569 = vmatprep.subr.bf16.mxu0 0
    %570 = vmatpush1.bf16.msra.mxu0 %v411
    %571 = vmatprep.subr.bf16.mxu0 0
    %572 = vmatpush1.bf16.msra.mxu0 %v412
    %573 = vmatprep.mubr.bf16.mxu0 %v164
    %574 = vmatmul.mubr.bf16.gmra.mrb[0].mxu0 %v150
    %v575 = vpop.f32.mrb[0].mxu0
    %v576 = vadd.f32 %v536, %v575
    %v577 = vpop.f32.mrb[0].mxu0
    %v578 = vpop.f32.mrb[0].mxu0
    %v579 = vpop.f32.mrb[0].mxu0
    %580 = vdwg.mxu0
    %v581 = vld [vmem:[%s2] sm:$0xff]
    %v582 = vlaneseq
    %v583 = vshrl.u32 %v582, 7
    %v584 = vsub.s32 0, %v583
    %v585 = vrot.slane %v576, %v584
    %v586 = vadd.f32 %v585, %v581
    %v587 = vpack.c.bf16 %v586, %v586
    %v588 = vld [vmem:[%s3] sm:$0xf]
    %v589 = vld [vmem:[%s3 + $0x4] sm:$0xf]
    %v590 = vld [vmem:[%s3 + $0x8] sm:$0xf]
    %v591 = vld [vmem:[%s3 + $0xc] sm:$0xf]
    %v596 = vunpack.c.l.b16 %v588
    %v597 = vunpack.c.l.b16 %v589
    %v598 = vunpack.c.l.b16 %v590
    %v599 = vunpack.c.l.b16 %v591
    %v600 = vpack.c.b16 %v597, %v596
    %v601 = vpack.c.b16 %v599, %v598
    %vm604 = vcmask 261120
    %v606 = vsel %vm604, %v587, 0
    %608 = vmatprep.subr.bf16.mxu0 0
    %609 = vmatpush1.bf16.msra.mxu0 %v600
    %610 = vmatprep.subr.bf16.mxu0 0
    %611 = vmatpush1.bf16.msra.mxu0 %v601
    %612 = vmatprep.subr.bf16.mxu0 0
    %613 = vmatpush1.bf16.msra.mxu0 0
    %614 = vmatprep.subr.bf16.mxu0 0
    %615 = vmatpush1.bf16.msra.mxu0 0
    %616 = vmatprep.subr.bf16.mxu0 0
    %617 = vmatpush1.bf16.msra.mxu0 0
    %618 = vmatprep.subr.bf16.mxu0 0
    %619 = vmatpush1.bf16.msra.mxu0 0
    %620 = vmatprep.subr.bf16.mxu0 0
    %621 = vmatpush1.bf16.msra.mxu0 0
    %622 = vmatprep.subr.bf16.mxu0 0
    %623 = vmatpush1.bf16.msra.mxu0 0
    %624 = vmatprep.subr.bf16.mxu0 0
    %625 = vmatpush1.bf16.msra.mxu0 0
    %626 = vmatprep.subr.bf16.mxu0 0
    %627 = vmatpush1.bf16.msra.mxu0 0
    %628 = vmatprep.subr.bf16.mxu0 0
    %629 = vmatpush1.bf16.msra.mxu0 0
    %630 = vmatprep.subr.bf16.mxu0 0
    %631 = vmatpush1.bf16.msra.mxu0 0
    %632 = vmatprep.subr.bf16.mxu0 0
    %633 = vmatpush1.bf16.msra.mxu0 0
    %634 = vmatprep.subr.bf16.mxu0 0
    %635 = vmatpush1.bf16.msra.mxu0 0
    %636 = vmatprep.subr.bf16.mxu0 0
    %637 = vmatpush1.bf16.msra.mxu0 0
    %638 = vmatprep.subr.bf16.mxu0 0
    %639 = vmatpush1.bf16.msra.mxu0 0
    %640 = vmatprep.mubr.bf16.mxu0 0
    %641 = vmatmul.mubr.bf16.gmra.mrb[0].mxu0 %v606
    %v642 = vpop.f32.mrb[0].mxu0
    %v643 = vadd.f32 0.0, %v642
    %v644 = vpop.f32.mrb[0].mxu0
    %v645 = vpop.f32.mrb[0].mxu0
    %v646 = vpop.f32.mrb[0].mxu0
    %647 = vdwg.mxu0
    %v648 = vlaneseq
    %v649 = vand.u32 %v648, 127
    %vm650 = vcmp.eq.s32.totalorder %v649, 0
    %v651 = vsel %vm650, %v643, 0.0
    %652 = vadd.xlane.f32.xlu0 %v651
    %v653 = vpop.xlane.xlu0 %652
    %vm654 = vcmp.eq.s32.totalorder %v649, 1
    %v655 = vsel %vm654, %v643, 0.0
    %656 = vadd.xlane.f32.xlu0 %v655
    %v657 = vpop.xlane.xlu0 %656
    %vm658 = vcmp.eq.s32.totalorder %v649, 2
    %v659 = vsel %vm658, %v643, 0.0
    %660 = vadd.xlane.f32.xlu0 %v659
    %v661 = vpop.xlane.xlu0 %660
    %vm662 = vcmp.eq.s32.totalorder %v649, 3
    %v663 = vsel %vm662, %v643, 0.0
    %664 = vadd.xlane.f32.xlu0 %v663
    %v665 = vpop.xlane.xlu0 %664
    %v666 = vmax.f32 %v661, %v665
    %v667 = vmax.f32 %v653, %v657
    %vm668 = vcmp.gt.f32.partialorder %v666, %v667
    %v669 = vsel %vm668, %v661, %v653
    %v670 = vsel %vm668, %v665, %v657
    %v671 = vmax.f32 %v669, %v670
    %v672 = vsub.f32 %v669, %v671
    %v673 = vmul.f32 %v672, 1.442695
    %v674 = vpow.pop %v673
    %v675 = vsub.f32 %v670, %v671
    %v676 = vmul.f32 %v675, 1.442695
    %v677 = vpow.pop %v676
    %v678 = vadd.f32 %v674, %v677
    %v679 = vrcp.pop %v678
    %v680 = vmul.f32 %v677, %v679
    %681 = vst [vmem:[#allocation4] sm:$0xff] %v680
    %vm682 = vcmp.gt.f32.partialorder %v680, 0.5
    %v683 = vsel %vm682, 1, 0
    %684 = vst [vmem:[#allocation2] sm:$0xff] %v683
    // Predicated region
    $region18: #{tpu_custom_call.1} parent=1 // pred_check
      _
    $region19: #{tpu_custom_call.1} parent=1 // pred_check_branch
      %686 = sbr.rel (0) target = $region21
    $region20: #{tpu_custom_call.1} parent=1 // pred_region
      %s688 = ssub.s32 128, 128
      %689 = vsyncadd [#allocation3], %s688
      %s691 = sshll.u32 [#allocation2], 4
      %s692 = int_to_ptr.vmem [resolvable:$true] %s691
      %694 = dma.vmem_to_hbm [thread:$0]  %s692, 128, %s4, [#allocation3]
    $region21: #{tpu_custom_call.1} parent=1 // pred_fallthru
      _
    // Predicated region
    $region22: #{tpu_custom_call.1} parent=1 // pred_check
      _
    $region23: #{tpu_custom_call.1} parent=1 // pred_check_branch
      %696 = sbr.rel (0) target = $region25
    $region24: #{tpu_custom_call.1} parent=1 // pred_region
      %s698 = ssub.s32 128, 128
      %699 = vsyncadd [#allocation5], %s698
      %s701 = sshll.u32 [#allocation4], 4
      %s702 = int_to_ptr.vmem [resolvable:$true] %s701
      %704 = dma.vmem_to_hbm [thread:$0]  %s702, 128, %s5, [#allocation5]
    $region25: #{tpu_custom_call.1} parent=1 // pred_fallthru
      _
    // Predicated region
    $region26: #{tpu_custom_call.1} parent=1 // pred_check
      _
    $region27: #{tpu_custom_call.1} parent=1 // pred_check_branch
      %706 = sbr.rel (0) target = $region29
    $region28: #{tpu_custom_call.1} parent=1 // pred_region
      %707 = dma.done [#allocation3], 128
    $region29: #{tpu_custom_call.1} parent=1 // pred_fallthru
      _
    // Predicated region
    $region30: #{tpu_custom_call.1} parent=1 // pred_check
      _
    $region31: #{tpu_custom_call.1} parent=1 // pred_check_branch
      %709 = sbr.rel (0) target = $region33
    $region32: #{tpu_custom_call.1} parent=1 // pred_region
      %710 = dma.done [#allocation5], 128
    $region33: #{tpu_custom_call.1} parent=1 // pred_fallthru
      _
    %711 = vsyncpa [#allocation3], 1
    %712 = vsyncpa [#allocation5], 1

</llo_original>
